<compile_context>
chip_gen: v7x
topology: tpu7x:2x2x1
jax: 0.10.0
libtpu: 0.0.40
codegen_flags: <defaults>
</compile_context>

<pallas_src>
import jax
import jax.numpy as jnp
from jax import lax
from jax.experimental import pallas as pl
from jax.experimental.pallas import tpu as pltpu


def pam_kernel(xk_ref, m_ref, wgmt_ref, gamma_ref, o_ref):
    # xk_ref:   (1, HW, Cp) full key/value slab (compute dtype)
    # m_ref:    (Cp, Cp) fused Wtheta^T Wphi
    # wgmt_ref: (Cp, Cp) fused (Wmask Wg)^T
    # gamma_ref:(1,) f32 in SMEM
    # o_ref:    (1, TQ, Cp) output query tile
    tq = o_ref.shape[1]
    q = pl.program_id(1)
    start = pl.multiple_of(q * tq, tq)

    xk = xk_ref[0]                                   # (HW, Cp), native compute dtype
    xq = xk_ref[0, pl.ds(start, tq), :]              # (TQ, Cp) query tile from the slab
    m_fused = m_ref[...]                             # (Cp, Cp)
    wgmt = wgmt_ref[...]                             # (Cp, Cp)
    gamma = gamma_ref[0]                             # scalar f32

    # P = Xq @ (Wtheta^T Wphi) -> (TQ, Cp); contraction over Cp.
    p = lax.dot_general(xq, m_fused, (((1,), (0,)), ((), ())),
                        preferred_element_type=jnp.float32)

    # logits = P @ Xk^T -> (TQ, HW); trans_b dot (no explicit transpose).
    logits = lax.dot_general(p.astype(xk.dtype), xk, (((1,), (1,)), ((), ())),
                             preferred_element_type=jnp.float32)

    # Row-wise softmax over keys, with DEFERRED normalization: feed the
    # unnormalized exp() into the value dot and scale the small (TQ, Cp)
    # result afterwards (one less (TQ, HW) multiply + f32 temp).
    row_max = jnp.max(logits, axis=-1, keepdims=True)
    e = jnp.exp(logits - row_max)                    # (TQ, HW) f32, unnormalized
    denom = jnp.sum(e, axis=-1, keepdims=True)       # (TQ, 1)  f32

    # y = e @ Xk -> (TQ, Cp); contraction over HW (large), then normalize.
    y = lax.dot_general(e.astype(xk.dtype), xk, (((1,), (0,)), ((), ())),
                        preferred_element_type=jnp.float32)
    y = y * pl.reciprocal(denom, approx=True)        # (TQ, Cp) f32

    # mask = y @ (Wmask Wg)^T -> (TQ, Cp); contraction over Cp.
    mask = lax.dot_general(y.astype(wgmt.dtype), wgmt, (((1,), (0,)), ((), ())),
                           preferred_element_type=jnp.float32)

    # Residual: out = mask * gamma + x
    o_ref[0] = (mask * gamma + xq.astype(jnp.float32)).astype(o_ref.dtype)


def _round_up(x, m):
    return ((x + m - 1) // m) * m


def _vmem_capacity_bytes():
    """Per-core VMEM capacity, with a conservative (v7x per-TC) fallback."""
    try:
        cap = int(pltpu.get_tpu_info().vmem_capacity_bytes)
        if cap > 0:
            return cap
    except Exception:
        pass
    return 64 * 1024 * 1024


def _vmem_estimate(hw, cp, tq, cdt_size, out_size):
    """Rough live-VMEM estimate for one grid step (double-buffered inputs)."""
    xk = 2 * hw * cp * cdt_size                        # key/value slab (x2 buffers)
    w = 2 * 2 * cp * cp * cdt_size                     # two fused (Cp, Cp) weights
    out = 2 * tq * cp * out_size                       # output tile
    interm = tq * hw * (4 + cdt_size)                  # logits f32 + e (compute dtype)
    interm += 3 * tq * cp * 4                          # p / y / mask f32
    return xk + w + out + interm


def _choose_query_tile(hw, cp, cdt_size, out_size, budget):
    """Largest lane/sublane-friendly query tile that fits the VMEM budget."""
    if _vmem_estimate(hw, cp, hw, cdt_size, out_size) <= budget:
        return hw                                      # single tile covers all queries
    # Prefer MXU-filling multiples of 128/256; never below 16 (bf16 sublane pack).
    for cand in (1024, 512, 384, 256, 128, 64, 32, 16):
        if hw % cand == 0 and _vmem_estimate(hw, cp, cand, cdt_size, out_size) <= budget:
            return cand
    # Best effort if nothing fits the budget (flash-style key tiling TODO above).
    for cand in (16, 32, 64, 128, 256, 384, 512, 1024):
        if hw % cand == 0:
            return cand
    return hw


def pam_forward(x_nchw, w_phi, w_theta, w_g, w_mask, gamma, *, compute_dtype=None):
    """x_nchw: (B, C, H, W). Weights: (IC, C) x3, (C, IC). gamma: (1,) f32."""
    B, C, H, W = x_nchw.shape
    HW = H * W

    if compute_dtype is None:
        # bf16 attention math (f32 accumulation) when the model runs in f32.
        compute_dtype = jnp.bfloat16 if x_nchw.dtype == jnp.float32 else x_nchw.dtype

    # Fuse the 1x1-conv weights in f32, then cast to the MXU compute dtype.
    f32 = jnp.float32
    m_fused = w_theta.astype(f32).T @ w_phi.astype(f32)          # (C, C)
    wgm_t = (w_mask.astype(f32) @ w_g.astype(f32)).T             # (C, C)

    # Lane density: pad channels to a multiple of 128 (zeros are inert).
    cp = _round_up(C, 128)
    if cp != C:
        padc = cp - C
        m_fused = jnp.pad(m_fused, ((0, padc), (0, padc)))
        wgm_t = jnp.pad(wgm_t, ((0, padc), (0, padc)))
    m_fused = m_fused.astype(compute_dtype)
    wgm_t = wgm_t.astype(compute_dtype)

    # NCHW -> (B, HW, Cp), channels-last for standard / trans_b MXU dots.
    x_flat = jnp.transpose(x_nchw, (0, 2, 3, 1)).reshape(B, HW, C)
    if cp != C:
        x_flat = jnp.pad(x_flat, ((0, 0), (0, 0), (0, cp - C)))
    x_flat = x_flat.astype(compute_dtype)

    cdt_size = jnp.dtype(compute_dtype).itemsize
    out_size = jnp.dtype(x_nchw.dtype).itemsize
    capacity = _vmem_capacity_bytes()
    budget = capacity // 2                                       # pipelining headroom
    tq = _choose_query_tile(HW, cp, cdt_size, out_size, budget)
    n_q = HW // tq
    est = _vmem_estimate(HW, cp, tq, cdt_size, out_size)
    vmem_limit = int(min(capacity, max(2 * est, 32 * 1024 * 1024)))

    out_flat = pl.pallas_call(
        pam_kernel,
        out_shape=jax.ShapeDtypeStruct((B, HW, cp), x_nchw.dtype),
        grid=(B, n_q),
        in_specs=[
            pl.BlockSpec((1, HW, cp), lambda b, q: (b, 0, 0)),   # full key/value slab
            pl.BlockSpec((cp, cp), lambda b, q: (0, 0)),         # fused M
            pl.BlockSpec((cp, cp), lambda b, q: (0, 0)),         # fused (Wmask Wg)^T
            pl.BlockSpec(memory_space=pltpu.SMEM),               # gamma
        ],
        out_specs=pl.BlockSpec((1, tq, cp), lambda b, q: (b, q, 0)),
        compiler_params=pltpu.CompilerParams(
            dimension_semantics=("parallel", "parallel"),
            vmem_limit_bytes=vmem_limit),
    )(x_flat, m_fused, wgm_t, gamma.astype(jnp.float32))

    # (B, HW, Cp) -> drop channel padding -> NCHW.
    out = out_flat[:, :, :C].reshape(B, H, W, C)
    return jnp.transpose(out, (0, 3, 1, 2))


def pam_reference(x_nchw, w_phi, w_theta, w_g, w_mask, gamma):
    """Pure-JAX reference mirroring the PyTorch forward (un-fused, f32)."""
    B, C, H, W = x_nchw.shape
    HW = H * W
    xf = x_nchw.reshape(B, C, HW)                         # (B, C, HW)
    x_phi = jnp.einsum('oc,bcp->bop', w_phi, xf)          # (B, IC, HW)
    x_theta = jnp.einsum('oc,bcp->bpo', w_theta, xf)      # (B, HW, IC)
    x_g = jnp.einsum('oc,bcp->bpo', w_g, xf)              # (B, HW, IC)
    attn = jax.nn.softmax(jnp.einsum('bpo,boq->bpq', x_theta, x_phi), axis=-1)
    y = jnp.einsum('bpq,bqo->bpo', attn, x_g)             # (B, HW, IC)
    y = jnp.transpose(y, (0, 2, 1)).reshape(B, w_mask.shape[1], H, W)
    mask = jnp.einsum('co,bohw->bchw', w_mask, y)
    return mask * gamma[0] + x_nchw


if __name__ == "__main__":
    # Small shapes consistent with PAM: channel must be divisible by ratio=16.
    B, C, H, W = 2, 32, 8, 8
    IC = C // 16  # inter_channel = 2

    key = jax.random.PRNGKey(0)
    kx, k1, k2, k3, k4 = jax.random.split(key, 5)

    x = jax.random.normal(kx, (B, C, H, W), dtype=jnp.float32)

    scale_in = 1.0 / jnp.sqrt(jnp.float32(C))
    scale_ic = 1.0 / jnp.sqrt(jnp.float32(IC))
    w_phi = jax.random.normal(k1, (IC, C), dtype=jnp.float32) * scale_in
    w_theta = jax.random.normal(k2, (IC, C), dtype=jnp.float32) * scale_in
    w_g = jax.random.normal(k3, (IC, C), dtype=jnp.float32) * scale_in
    w_mask = jax.random.normal(k4, (C, IC), dtype=jnp.float32) * scale_ic
    # PyTorch __init__ uses gamma=0 (output == x); use a nonzero value so the
    # full attention path is exercised and verified.
    gamma = jnp.array([0.5], dtype=jnp.float32)

    ref = pam_reference(x, w_phi, w_theta, w_g, w_mask, gamma)

    # Default path: bf16 operands, f32 accumulation (MXU fast path).
    out_bf16 = jax.block_until_ready(
        pam_forward(x, w_phi, w_theta, w_g, w_mask, gamma))
    # Full-f32 compute path for tight numerical validation.
    out_f32 = jax.block_until_ready(
        pam_forward(x, w_phi, w_theta, w_g, w_mask, gamma,
                    compute_dtype=jnp.float32))

    assert out_bf16.shape == (B, C, H, W)
    assert out_f32.shape == (B, C, H, W)

    err_f32 = jnp.max(jnp.abs(out_f32 - ref))
    assert jnp.allclose(out_f32, ref, atol=2e-3, rtol=2e-3), (
        f"f32 path mismatch vs reference, max abs err = {err_f32}")

    err_bf16 = jnp.max(jnp.abs(out_bf16 - ref))
    assert jnp.allclose(out_bf16, ref, atol=5e-2, rtol=5e-2), (
        f"bf16 path mismatch vs reference, max abs err = {err_bf16}")

    print("KERNEL_OK")
</pallas_src>

<mosaic_0001>
module attributes {stable_mosaic.version = 11 : i64} {
  func.func @pam_kernel(%arg0: i32, %arg1: i32, %arg2: memref<1x64x128xbf16, #tpu.memory_space<vmem>>, %arg3: memref<128x128xbf16, #tpu.memory_space<vmem>>, %arg4: memref<128x128xbf16, #tpu.memory_space<vmem>>, %arg5: memref<1xf32, #tpu.memory_space<smem>>, %arg6: memref<1x64x128xf32, #tpu.memory_space<vmem>>) attributes {dimension_semantics = [#tpu.dimension_semantics<parallel>, #tpu.dimension_semantics<parallel>], iteration_bounds = array<i64: 2, 1>, scalar_prefetch = 0 : i64, scratch_operands = 0 : i64, tpu.core_type = #tpu.core_type<tc>, window_params = [{transform_indices = @transform_0, window_bounds = array<i64: 1, 64, 128>}, {pipeline_mode = #tpu.pipeline_mode<synchronous>, transform_indices = @transform_1, window_bounds = array<i64: 128, 128>}, {pipeline_mode = #tpu.pipeline_mode<synchronous>, transform_indices = @transform_2, window_bounds = array<i64: 128, 128>}, {transform_indices = @transform_3, window_bounds = array<i64: 1>}, {transform_indices = @transform_4, window_bounds = array<i64: 1, 64, 128>}]} {
    %c64_i32 = arith.constant 64 : i32
    %0 = arith.muli %arg1, %c64_i32 : i32
    %1 = tpu.assume_multiple %0, 64 : i32
    %c0 = arith.constant 0 : index
    %c0_0 = arith.constant 0 : index
    %c0_1 = arith.constant 0 : index
    %2 = vector.load %arg2[%c0, %c0_0, %c0_1] : memref<1x64x128xbf16, #tpu.memory_space<vmem>>, vector<1x64x128xbf16>
    %3 = vector.shape_cast %2 : vector<1x64x128xbf16> to vector<64x128xbf16>
    %c0_2 = arith.constant 0 : index
    %4 = arith.index_cast %1 : i32 to index
    %c0_3 = arith.constant 0 : index
    %5 = vector.load %arg2[%c0_2, %4, %c0_3] : memref<1x64x128xbf16, #tpu.memory_space<vmem>>, vector<1x64x128xbf16>
    %6 = vector.shape_cast %5 : vector<1x64x128xbf16> to vector<64x128xbf16>
    %c0_4 = arith.constant 0 : index
    %c0_5 = arith.constant 0 : index
    %7 = vector.load %arg3[%c0_4, %c0_5] : memref<128x128xbf16, #tpu.memory_space<vmem>>, vector<128x128xbf16>
    %c0_6 = arith.constant 0 : index
    %c0_7 = arith.constant 0 : index
    %8 = vector.load %arg4[%c0_6, %c0_7] : memref<128x128xbf16, #tpu.memory_space<vmem>>, vector<128x128xbf16>
    %c0_8 = arith.constant 0 : index
    %9 = memref.load %arg5[%c0_8] : memref<1xf32, #tpu.memory_space<smem>>
    %cst = arith.constant dense<0.000000e+00> : vector<64x128xf32>
    %10 = tpu.matmul %6, %7, %cst {dimension_numbers = #tpu.dot_dimension_numbers<[1], [0], [0], [1], [0, 0, 1, 1], [], []>} : vector<64x128xbf16>, vector<128x128xbf16>, vector<64x128xf32> -> vector<64x128xf32>
    %11 = arith.truncf %10 : vector<64x128xf32> to vector<64x128xbf16>
    %cst_9 = arith.constant dense<0.000000e+00> : vector<64x64xf32>
    %12 = tpu.matmul %11, %3, %cst_9 {dimension_numbers = #tpu.dot_dimension_numbers<[1], [1], [0], [0], [0, 0, 1, 0], [], []>} : vector<64x128xbf16>, vector<64x128xbf16>, vector<64x64xf32> -> vector<64x64xf32>
    %cst_10 = arith.constant dense<0xFF800000> : vector<64xf32>
    %13 = vector.multi_reduction <maximumf>, %12, %cst_10 [1] : vector<64x64xf32> to vector<64xf32>
    %14 = vector.shape_cast %13 : vector<64xf32> to vector<64x1xf32>
    %15 = vector.broadcast %14 : vector<64x1xf32> to vector<64x64xf32>
    %16 = arith.subf %12, %15 : vector<64x64xf32>
    %17 = math.exp %16 : vector<64x64xf32>
    %cst_11 = arith.constant dense<0.000000e+00> : vector<64xf32>
    %18 = vector.multi_reduction <add>, %17, %cst_11 [1] : vector<64x64xf32> to vector<64xf32>
    %19 = vector.shape_cast %18 : vector<64xf32> to vector<64x1xf32>
    %20 = arith.truncf %17 : vector<64x64xf32> to vector<64x64xbf16>
    %cst_12 = arith.constant dense<0.000000e+00> : vector<64x128xf32>
    %21 = tpu.matmul %20, %3, %cst_12 {dimension_numbers = #tpu.dot_dimension_numbers<[1], [0], [0], [1], [0, 0, 1, 1], [], []>} : vector<64x64xbf16>, vector<64x128xbf16>, vector<64x128xf32> -> vector<64x128xf32>
    %22 = tpu.reciprocal %19 {approx = true} : vector<64x1xf32> -> vector<64x1xf32>
    %23 = vector.broadcast %22 : vector<64x1xf32> to vector<64x128xf32>
    %24 = arith.mulf %21, %23 : vector<64x128xf32>
    %25 = arith.truncf %24 : vector<64x128xf32> to vector<64x128xbf16>
    %cst_13 = arith.constant dense<0.000000e+00> : vector<64x128xf32>
    %26 = tpu.matmul %25, %8, %cst_13 {dimension_numbers = #tpu.dot_dimension_numbers<[1], [0], [0], [1], [0, 0, 1, 1], [], []>} : vector<64x128xbf16>, vector<128x128xbf16>, vector<64x128xf32> -> vector<64x128xf32>
    %27 = vector.broadcast %9 : f32 to vector<64x128xf32>
    %28 = arith.mulf %26, %27 : vector<64x128xf32>
    %29 = arith.extf %6 : vector<64x128xbf16> to vector<64x128xf32>
    %30 = arith.addf %28, %29 : vector<64x128xf32>
    %c0_14 = arith.constant 0 : index
    %c0_15 = arith.constant 0 : index
    %c0_16 = arith.constant 0 : index
    %31 = vector.load %arg6[%c0_14, %c0_15, %c0_16] : memref<1x64x128xf32, #tpu.memory_space<vmem>>, vector<1x64x128xf32>
    %32 = vector.shape_cast %31 : vector<1x64x128xf32> to vector<64x128xf32>
    %33 = vector.shape_cast %30 : vector<64x128xf32> to vector<1x64x128xf32>
    tpu.vector_store %arg6[%c0_14, %c0_15, %c0_16], %33 {strides = array<i32>} : memref<1x64x128xf32, #tpu.memory_space<vmem>>, vector<1x64x128xf32>,
    return
  }
  func.func @transform_0(%arg0: i32, %arg1: i32) -> (i32, i32, i32) {
    %c0_i32 = arith.constant 0 : i32
    %c0_i32_0 = arith.constant 0 : i32
    %c0_i32_1 = arith.constant 0 : i32
    return %arg0, %c0_i32, %c0_i32_0 : i32, i32, i32
  }
  func.func @transform_1(%arg0: i32, %arg1: i32) -> (i32, i32) {
    %c0_i32 = arith.constant 0 : i32
    %c0_i32_0 = arith.constant 0 : i32
    %c0_i32_1 = arith.constant 0 : i32
    return %c0_i32, %c0_i32_0 : i32, i32
  }
  func.func @transform_2(%arg0: i32, %arg1: i32) -> (i32, i32) {
    %c0_i32 = arith.constant 0 : i32
    %c0_i32_0 = arith.constant 0 : i32
    %c0_i32_1 = arith.constant 0 : i32
    return %c0_i32, %c0_i32_0 : i32, i32
  }
  func.func @transform_3(%arg0: i32, %arg1: i32) -> i32 {
    %c0_i32 = arith.constant 0 : i32
    %c0_i32_0 = arith.constant 0 : i32
    return %c0_i32 : i32
  }
  func.func @transform_4(%arg0: i32, %arg1: i32) -> (i32, i32, i32) {
    %c0_i32 = arith.constant 0 : i32
    %c0_i32_0 = arith.constant 0 : i32
    return %arg0, %arg1, %c0_i32 : i32, i32, i32
  }
}

</mosaic_0001>

<llo_original>
// kernel: tpu_custom_call.1
$region0: #{tpu_custom_call.1}
  #allocation0 [shape = 'u32[]', space=smem, size = 0x4, offset = 0x4, fixed_abs, tag = 'smem constant byte address 0x4 - core index']
  #allocation1 [shape = 'u32[144,128]{1,0:T(1,128)}', space=vmem, size = 0x12000, scoped, tag = 'internal scratch']
  #allocation2 [shape = 'f32[1]{0:T(128)S(6)}', space=smem, size = 0x200, scoped, tag = 'scoped memory for tpu_custom_call.1']
  %s0 = inlined_call_operand.hbm [shape: bf16[2,64,128], index: 0, kind: input, shape index: {}]
  %s1 = inlined_call_operand.hbm [shape: bf16[128,128], index: 1, kind: input, shape index: {}]
  %s2 = inlined_call_operand.hbm [shape: bf16[128,128], index: 2, kind: input, shape index: {}]
  %s3 = inlined_call_operand.<no memory space> [shape: f32[1], index: 3, kind: input, shape index: {}]
  %s4 = inlined_call_operand.hbm [shape: f32[2,64,128], index: 4, kind: output, shape index: {}]
  %s5 = sld [smem:[#allocation0]]
  $region61: #{tpu_custom_call.1} parent=0
    _
  %s7 = ssub.s32 1, %s5
  %s8 = scalar_select 0, %s7, %s5
  %9 = sst [smem:[#allocation2]] %s3
  $region1: #{tpu_custom_call.1} parent=0
    #allocation3 [shape = 'u8[32768]{0}', space=vmem, size = 0x8000, scoped, tag = 'input window, operand 0']
    #allocation4 [shape = 's32[2]{0}', space=sflag, size = 0x8, scoped, tag = 'scoped memory for tpu_custom_call.1']
    #allocation5 [shape = 's32[2]{0}', space=sflag, size = 0x8, scoped, tag = 'scoped memory for tpu_custom_call.1']
    #allocation6 [shape = 'u8[32768]{0}', space=vmem, size = 0x8000, scoped, tag = 'input window, operand 1, single buffered']
    #allocation7 [shape = 's32[1]{0}', space=sflag, size = 0x4, scoped, tag = 'scoped memory for tpu_custom_call.1']
    #allocation8 [shape = 'u8[32768]{0}', space=vmem, size = 0x8000, scoped, tag = 'input window, operand 2, single buffered']
    #allocation9 [shape = 'u8[65536]{0}', space=vmem, size = 0x10000, scoped, tag = 'output window, operand 0']
    %10 = vsyncpa [#allocation4], 0
    %s11 = scalar_lea.sflag [#allocation4], 1
    %12 = vsyncpa %s11, 0
    %13 = vsyncpa [#allocation7], 0
    %14 = vsyncpa [#allocation5], 0
    %s15 = scalar_lea.sflag [#allocation5], 1
    %16 = vsyncpa %s15, 0
    loop: start=0, step=1, limit=4
    $region2: #{tpu_custom_call.1} parent=1 // loop_pre_header
      _
    $region3: #{tpu_custom_call.1} parent=1 // loop_header
      %s18 = sphi 0, %s22
      %p19 = scmp.ge.s32.totalorder %s18, 4
      %s25 = sphi 0, %s37
      %s26 = sphi 0, %s33
      %s27 = sphi 0, %s25
      %s28 = sphi 0, %s26
      %s29 = sphi 0, %s27
      %s30 = sphi 0, %s28
      %s40 = sphi 0, %s42
      %s43 = sphi 0, %s40
      %s44 = sphi 0, %s43
      %s60 = sphi 0, %s44
      %s64 = sphi 0, %s64
      %s66 = sphi 0, %s64
      %s67 = sphi 0, %s66
      %s81 = sphi 0, %s67
      %s85 = sphi 0, %s85
      %s87 = sphi 0, %s85
      %s88 = sphi 0, %s87
      %s102 = sphi 0, %s88
      %s106 = sphi 0, %s106
      %s108 = sphi 0, %s106
      %s109 = sphi 0, %s108
      %s123 = sphi 0, %s109
      %s131 = sphi 0, %s133
      %s134 = sphi 0, %s131
      %s135 = sphi 0, %s134
      %s151 = sphi 0, %s135
    $region4: #{tpu_custom_call.1} parent=1 // loop_header_branch
      %21 = sbr.rel (%p19) target = $region8
    $region5: #{tpu_custom_call.1} parent=1 // loop_body
      %s23 = ssub.s32 %s18, 1
      %s24 = ssub.s32 %s18, 2
      %s31 = sadd.s32 1, %s26
      %p32 = scmp.ge.s32.totalorder %s31, 1
      %s33 = scalar_select %p32, 0, %s31
      %s34 = sadd.s32 1, %s25
      %s35 = scalar_select %p32, %s34, %s25
      %p36 = scmp.ge.s32.totalorder %s35, 2
      %s37 = scalar_select %p36, 0, %s35
      %s38 = ssub.s32 %s25, %s37
      %p39 = scmp.eq.s32.totalorder %s38, 0
      %s41 = sadd.s32 %s40, 1
      %s42 = scalar_select %p39, %s40, %s41
      %p45 = pneg %p39
      %p46 = scmp.eq.s32.totalorder %s18, 1
      %p47 = por %p45, %p46
      %p48 = scmp.ne.s32.totalorder %s40, %s43
      %p49 = scmp.eq.s32.totalorder %s18, 0
      %p50 = por %p48, %p49
      %p51 = scmp.ne.s32.totalorder %s40, %s43
      %p52 = scmp.eq.s32.totalorder %s23, 1
      %p53 = por %p51, %p52
      %p54 = scmp.ne.s32.totalorder %s43, %s44
      %p55 = scmp.eq.s32.totalorder %s23, 0
      %p56 = por %p54, %p55
      %p57 = scmp.ne.s32.totalorder %s43, %s44
      %p58 = scmp.eq.s32.totalorder %s24, 1
      %p59 = por %p57, %p58
      %p61 = scmp.ne.s32.totalorder %s44, %s60
      %p62 = scmp.eq.s32.totalorder %s24, 0
      %p63 = por %p61, %p62
      %s65 = sadd.s32 %s64, 1
      %p68 = scmp.eq.s32.totalorder %s18, 1
      %p69 = scmp.ne.s32.totalorder %s64, %s66
      %p70 = scmp.eq.s32.totalorder %s18, 0
      %p71 = por %p69, %p70
      %p72 = scmp.ne.s32.totalorder %s64, %s66
      %p73 = scmp.eq.s32.totalorder %s23, 1
      %p74 = por %p72, %p73
      %p75 = scmp.ne.s32.totalorder %s66, %s67
      %p76 = scmp.eq.s32.totalorder %s23, 0
      %p77 = por %p75, %p76
      %p78 = scmp.ne.s32.totalorder %s66, %s67
      %p79 = scmp.eq.s32.totalorder %s24, 1
      %p80 = por %p78, %p79
      %p82 = scmp.ne.s32.totalorder %s67, %s81
      %p83 = scmp.eq.s32.totalorder %s24, 0
      %p84 = por %p82, %p83
      %s86 = sadd.s32 %s85, 1
      %p89 = scmp.eq.s32.totalorder %s18, 1
      %p90 = scmp.ne.s32.totalorder %s85, %s87
      %p91 = scmp.eq.s32.totalorder %s18, 0
      %p92 = por %p90, %p91
      %p93 = scmp.ne.s32.totalorder %s85, %s87
      %p94 = scmp.eq.s32.totalorder %s23, 1
      %p95 = por %p93, %p94
      %p96 = scmp.ne.s32.totalorder %s87, %s88
      %p97 = scmp.eq.s32.totalorder %s23, 0
      %p98 = por %p96, %p97
      %p99 = scmp.ne.s32.totalorder %s87, %s88
      %p100 = scmp.eq.s32.totalorder %s24, 1
      %p101 = por %p99, %p100
      %p103 = scmp.ne.s32.totalorder %s88, %s102
      %p104 = scmp.eq.s32.totalorder %s24, 0
      %p105 = por %p103, %p104
      %s107 = sadd.s32 %s106, 1
      %p110 = scmp.eq.s32.totalorder %s18, 1
      %p111 = scmp.ne.s32.totalorder %s106, %s108
      %p112 = scmp.eq.s32.totalorder %s18, 0
      %p113 = por %p111, %p112
      %p114 = scmp.ne.s32.totalorder %s106, %s108
      %p115 = scmp.eq.s32.totalorder %s23, 1
      %p116 = por %p114, %p115
      %p117 = scmp.ne.s32.totalorder %s108, %s109
      %p118 = scmp.eq.s32.totalorder %s23, 0
      %p119 = por %p117, %p118
      %p120 = scmp.ne.s32.totalorder %s108, %s109
      %p121 = scmp.eq.s32.totalorder %s24, 1
      %p122 = por %p120, %p121
      %p124 = scmp.ne.s32.totalorder %s109, %s123
      %p125 = scmp.eq.s32.totalorder %s24, 0
      %p126 = por %p124, %p125
      %s127 = ssub.s32 %s25, %s37
      %s128 = ssub.s32 %s26, %s33
      %s129 = sor.u32 %s127, %s128
      %p130 = scmp.eq.s32.totalorder %s129, 0
      %s132 = sadd.s32 %s131, 1
      %s133 = scalar_select %p130, %s131, %s132
      %p136 = pneg %p130
      %p137 = scmp.eq.s32.totalorder %s18, 1
      %p138 = por %p136, %p137
      %p139 = scmp.ne.s32.totalorder %s131, %s134
      %p140 = scmp.eq.s32.totalorder %s18, 0
      %p141 = por %p139, %p140
      %p142 = scmp.ne.s32.totalorder %s131, %s134
      %p143 = scmp.eq.s32.totalorder %s23, 1
      %p144 = por %p142, %p143
      %p145 = scmp.ne.s32.totalorder %s134, %s135
      %p146 = scmp.eq.s32.totalorder %s23, 0
      %p147 = por %p145, %p146
      %p148 = scmp.ne.s32.totalorder %s134, %s135
      %p149 = scmp.eq.s32.totalorder %s24, 1
      %p150 = por %p148, %p149
      %p152 = scmp.ne.s32.totalorder %s135, %s151
      %p153 = scmp.eq.s32.totalorder %s24, 0
      %p154 = por %p152, %p153
      %p155 = scmp.le.s32.totalorder 1, %s18
      %p156 = scmp.lt.s32.totalorder %s18, 3
      %p157 = pnand %p155, %p156
      %p158 = pneg %p157
      // Predicated region
      $region9: #{tpu_custom_call.1} parent=5 // pred_check
        _
      $region10: #{tpu_custom_call.1} parent=5 // pred_check_branch
        %160 = sbr.rel (%p157) target = $region12
      $region11: #{tpu_custom_call.1} parent=5 // pred_region
        %s161 = ssub.s32 %s18, 1
        // Predicated region
        $region13: #{tpu_custom_call.1} parent=11 // pred_check
          %p162 = pneg %p77
        $region14: #{tpu_custom_call.1} parent=11 // pred_check_branch
          %164 = sbr.rel (%p162) target = $region16
        $region15: #{tpu_custom_call.1} parent=11 // pred_region
          %s166 = ssub.s32 1024, 1024
          %167 = vsyncadd [#allocation7], %s166
          %s168 = sshll.u32 [#allocation6], 4
          %s169 = int_to_ptr.vmem [resolvable:$true] %s168
          %174 = dma.hbm_to_vmem [thread:$0]  %s1, 1024, %s169, [#allocation7], 64, 64, 4
        $region16: #{tpu_custom_call.1} parent=11 // pred_fallthru
          _
        // Predicated region
        $region17: #{tpu_custom_call.1} parent=11 // pred_check
          %p175 = pneg %p98
        $region18: #{tpu_custom_call.1} parent=11 // pred_check_branch
          %177 = sbr.rel (%p175) target = $region20
        $region19: #{tpu_custom_call.1} parent=11 // pred_region
          %s179 = ssub.s32 1024, 1024
          %180 = vsyncadd [#allocation7], %s179
          %s181 = sshll.u32 [#allocation8], 4
          %s182 = int_to_ptr.vmem [resolvable:$true] %s181
          %187 = dma.hbm_to_vmem [thread:$0]  %s2, 1024, %s182, [#allocation7], 64, 64, 4
        $region20: #{tpu_custom_call.1} parent=11 // pred_fallthru
          _
        // Predicated region
        $region21: #{tpu_custom_call.1} parent=11 // pred_check
          %p188 = pneg %p119
        $region22: #{tpu_custom_call.1} parent=11 // pred_check_branch
          %190 = sbr.rel (%p188) target = $region24
        $region23: #{tpu_custom_call.1} parent=11 // pred_region
          _
        $region24: #{tpu_custom_call.1} parent=11 // pred_fallthru
          _
      $region12: #{tpu_custom_call.1} parent=5 // pred_fallthru
        _
      %p191 = scmp.lt.s32.totalorder %s18, 2
      // Predicated region
      $region25: #{tpu_custom_call.1} parent=5 // pred_check
        %p192 = pneg %p191
      $region26: #{tpu_custom_call.1} parent=5 // pred_check_branch
        %194 = sbr.rel (%p192) target = $region28
      $region27: #{tpu_custom_call.1} parent=5 // pred_region
        // Predicated region
        $region29: #{tpu_custom_call.1} parent=27 // pred_check
          %p195 = pneg %p50
        $region30: #{tpu_custom_call.1} parent=27 // pred_check_branch
          %197 = sbr.rel (%p195) target = $region32
        $region31: #{tpu_custom_call.1} parent=27 // pred_region
          %s198 = sand.u32 %s40, 1
          %s199 = scalar_lea.sflag [#allocation4], %s198
          %s200 = sand.u32 %s40, 1
          %s201 = smul.addr %s200, 32
          %s202 = scalar_lea.vmem [#allocation3], %s201
          %s204 = ssub.s32 512, 512
          %205 = vsyncadd %s199, %s204
          %s206 = smul.addr %s25, 8
          %s207 = smul.addr %s206, 64
          %s208 = scalar_lea.hbm %s0, %s207
          %s209 = sshll.u32 %s202, 4
          %s210 = int_to_ptr.vmem [resolvable:$true] %s209
          %215 = dma.hbm_to_vmem [thread:$0]  %s208, 512, %s210, %s199, 64, 64, 4
        $region32: #{tpu_custom_call.1} parent=27 // pred_fallthru
          _
      $region28: #{tpu_custom_call.1} parent=5 // pred_fallthru
        _
      %p216 = scmp.le.s32.totalorder 1, %s18
      %p217 = scmp.lt.s32.totalorder %s18, 3
      %p218 = pnand %p216, %p217
      %p219 = pneg %p218
      // Predicated region
      $region33: #{tpu_custom_call.1} parent=5 // pred_check
        _
      $region34: #{tpu_custom_call.1} parent=5 // pred_check_branch
        %221 = sbr.rel (%p218) target = $region36
      $region35: #{tpu_custom_call.1} parent=5 // pred_region
        %s222 = ssub.s32 %s18, 1
        %s223 = sand.u32 %s43, 1
        %s224 = scalar_lea.sflag [#allocation4], %s223
        %s225 = sand.u32 %s43, 1
        %s226 = smul.addr %s225, 32
        %s227 = scalar_lea.vmem [#allocation3], %s226
        // Predicated region
        $region37: #{tpu_custom_call.1} parent=35 // pred_check
          %p228 = pneg %p56
        $region38: #{tpu_custom_call.1} parent=35 // pred_check_branch
          %230 = sbr.rel (%p228) target = $region40
        $region39: #{tpu_custom_call.1} parent=35 // pred_region
          %231 = dma.done %s224, 512
        $region40: #{tpu_custom_call.1} parent=35 // pred_fallthru
          _
        // Predicated region
        $region41: #{tpu_custom_call.1} parent=35 // pred_check
          %p232 = pneg %p77
        $region42: #{tpu_custom_call.1} parent=35 // pred_check_branch
          %234 = sbr.rel (%p232) target = $region44
        $region43: #{tpu_custom_call.1} parent=35 // pred_region
          %235 = dma.done [#allocation7], 1024
        $region44: #{tpu_custom_call.1} parent=35 // pred_fallthru
          _
        // Predicated region
        $region45: #{tpu_custom_call.1} parent=35 // pred_check
          %p236 = pneg %p98
        $region46: #{tpu_custom_call.1} parent=35 // pred_check_branch
          %238 = sbr.rel (%p236) target = $region48
        $region47: #{tpu_custom_call.1} parent=35 // pred_region
          %239 = dma.done [#allocation7], 1024
        $region48: #{tpu_custom_call.1} parent=35 // pred_fallthru
          _
        %s240 = sand.u32 %s43, 1
        %s241 = scalar_lea.sflag [#allocation4], %s240
        %s242 = sand.u32 %s43, 1
        %s243 = smul.addr %s242, 32
        %s244 = scalar_lea.vmem [#allocation3], %s243
        %p245 = pneg %p56
        %p246 = pneg %p53
        %p247 = pneg %p77
        %p248 = pneg %p74
        %p249 = pneg %p98
        %p250 = pneg %p95
        %p251 = pneg %p119
        %p252 = pneg %p116
        %p253 = pneg %p147
        %p254 = pneg %p144
        %s255 = sand.u32 %s134, 1
        %s256 = scalar_lea.sflag [#allocation5], %s255
        %s257 = sand.u32 %s134, 1
        %s258 = smul.addr %s257, 64
        %s259 = scalar_lea.vmem [#allocation9], %s258
        %s260 = smul.u32 8, %s28
        %s262 = smul.u32 %s28, 64
        %v263 = vld [vmem:[%s227] sm:$0xf]
        %v264 = vld [vmem:[%s227 + $0x4] sm:$0xf]
        %v265 = vld [vmem:[%s227 + $0x8] sm:$0xf]
        %v266 = vld [vmem:[%s227 + $0xc] sm:$0xf]
        %v267 = vld [vmem:[%s227 + $0x10] sm:$0xf]
        %v268 = vld [vmem:[%s227 + $0x14] sm:$0xf]
        %v269 = vld [vmem:[%s227 + $0x18] sm:$0xf]
        %v270 = vld [vmem:[%s227 + $0x1c] sm:$0xf]
        %s271 = sshra.s32 %s262, 3
        %s272 = sand.u32 %s262, 7
        %s273 = smul.addr %s271, 4
        %s274 = scalar_lea.vmem %s227, %s273 [#allocation3]
        %v275 = vld [vmem:[%s274] sm:$0xf]
        %v276 = vld [vmem:[%s274 + $0x4] sm:$0xf]
        %v277 = vld [vmem:[%s274 + $0x8] sm:$0xf]
        %v278 = vld [vmem:[%s274 + $0xc] sm:$0xf]
        %v279 = vld [vmem:[%s274 + $0x10] sm:$0xf]
        %v280 = vld [vmem:[%s274 + $0x14] sm:$0xf]
        %v281 = vld [vmem:[%s274 + $0x18] sm:$0xf]
        %v282 = vld [vmem:[%s274 + $0x1c] sm:$0xf]
        %v283 = vld [vmem:[#allocation6] sm:$0xf]
        %v284 = vld [vmem:[#allocation6 + $0x4] sm:$0xf]
        %v285 = vld [vmem:[#allocation6 + $0x8] sm:$0xf]
        %v286 = vld [vmem:[#allocation6 + $0xc] sm:$0xf]
        %v287 = vld [vmem:[#allocation6 + $0x10] sm:$0xf]
        %v288 = vld [vmem:[#allocation6 + $0x14] sm:$0xf]
        %v289 = vld [vmem:[#allocation6 + $0x18] sm:$0xf]
        %v290 = vld [vmem:[#allocation6 + $0x1c] sm:$0xf]
        %v291 = vld [vmem:[#allocation6 + $0x20] sm:$0xf]
        %v292 = vld [vmem:[#allocation6 + $0x24] sm:$0xf]
        %v293 = vld [vmem:[#allocation6 + $0x28] sm:$0xf]
        %v294 = vld [vmem:[#allocation6 + $0x2c] sm:$0xf]
        %v295 = vld [vmem:[#allocation6 + $0x30] sm:$0xf]
        %v296 = vld [vmem:[#allocation6 + $0x34] sm:$0xf]
        %v297 = vld [vmem:[#allocation6 + $0x38] sm:$0xf]
        %v298 = vld [vmem:[#allocation6 + $0x3c] sm:$0xf]
        %v299 = vld [vmem:[#allocation8] sm:$0xf]
        %v300 = vld [vmem:[#allocation8 + $0x4] sm:$0xf]
        %v301 = vld [vmem:[#allocation8 + $0x8] sm:$0xf]
        %v302 = vld [vmem:[#allocation8 + $0xc] sm:$0xf]
        %v303 = vld [vmem:[#allocation8 + $0x10] sm:$0xf]
        %v304 = vld [vmem:[#allocation8 + $0x14] sm:$0xf]
        %v305 = vld [vmem:[#allocation8 + $0x18] sm:$0xf]
        %v306 = vld [vmem:[#allocation8 + $0x1c] sm:$0xf]
        %v307 = vld [vmem:[#allocation8 + $0x20] sm:$0xf]
        %v308 = vld [vmem:[#allocation8 + $0x24] sm:$0xf]
        %v309 = vld [vmem:[#allocation8 + $0x28] sm:$0xf]
        %v310 = vld [vmem:[#allocation8 + $0x2c] sm:$0xf]
        %v311 = vld [vmem:[#allocation8 + $0x30] sm:$0xf]
        %v312 = vld [vmem:[#allocation8 + $0x34] sm:$0xf]
        %v313 = vld [vmem:[#allocation8 + $0x38] sm:$0xf]
        %v314 = vld [vmem:[#allocation8 + $0x3c] sm:$0xf]
        %s315 = sld [smem:[#allocation2]]
        %v324 = vunpack.c.l.b16 %v275
        %v325 = vunpack.c.l.b16 %v276
        %v326 = vunpack.c.l.b16 %v277
        %v327 = vunpack.c.l.b16 %v278
        %v328 = vunpack.c.l.b16 %v279
        %v329 = vunpack.c.l.b16 %v280
        %v330 = vunpack.c.l.b16 %v281
        %v331 = vunpack.c.l.b16 %v282
        %v332 = vpack.c.b16 %v325, %v324
        %v333 = vpack.c.b16 %v327, %v326
        %v334 = vpack.c.b16 %v329, %v328
        %v335 = vpack.c.b16 %v331, %v330
        %v356 = vunpack.c.l.b16 %v283
        %v357 = vunpack.c.l.b16 %v284
        %v358 = vunpack.c.l.b16 %v285
        %v359 = vunpack.c.l.b16 %v286
        %v360 = vunpack.c.l.b16 %v287
        %v361 = vunpack.c.l.b16 %v288
        %v362 = vunpack.c.l.b16 %v289
        %v363 = vunpack.c.l.b16 %v290
        %v364 = vunpack.c.l.b16 %v291
        %v365 = vunpack.c.l.b16 %v292
        %v366 = vunpack.c.l.b16 %v293
        %v367 = vunpack.c.l.b16 %v294
        %v368 = vunpack.c.l.b16 %v295
        %v369 = vunpack.c.l.b16 %v296
        %v370 = vunpack.c.l.b16 %v297
        %v371 = vunpack.c.l.b16 %v298
        %v372 = vpack.c.b16 %v357, %v356
        %v373 = vpack.c.b16 %v359, %v358
        %v374 = vpack.c.b16 %v361, %v360
        %v375 = vpack.c.b16 %v363, %v362
        %v376 = vpack.c.b16 %v365, %v364
        %v377 = vpack.c.b16 %v367, %v366
        %v378 = vpack.c.b16 %v369, %v368
        %v379 = vpack.c.b16 %v371, %v370
        %388 = vmatprep.subr.bf16.mxu0 0
        %389 = vmatpush1.bf16.msra.mxu0 %v372
        %390 = vmatprep.subr.bf16.mxu0 0
        %391 = vmatpush1.bf16.msra.mxu0 %v373
        %392 = vmatprep.subr.bf16.mxu0 0
        %393 = vmatpush1.bf16.msra.mxu0 %v374
        %394 = vmatprep.subr.bf16.mxu0 0
        %395 = vmatpush1.bf16.msra.mxu0 %v375
        %396 = vmatprep.subr.bf16.mxu0 0
        %397 = vmatpush1.bf16.msra.mxu0 %v376
        %398 = vmatprep.subr.bf16.mxu0 0
        %399 = vmatpush1.bf16.msra.mxu0 %v377
        %400 = vmatprep.subr.bf16.mxu0 0
        %401 = vmatpush1.bf16.msra.mxu0 %v378
        %402 = vmatprep.subr.bf16.mxu0 0
        %403 = vmatpush1.bf16.msra.mxu0 %v379
        %404 = vmatprep.subr.bf16.mxu0 0
        %405 = vmatpush1.bf16.msra.mxu0 0
        %406 = vmatprep.subr.bf16.mxu0 0
        %407 = vmatpush1.bf16.msra.mxu0 0
        %408 = vmatprep.subr.bf16.mxu0 0
        %409 = vmatpush1.bf16.msra.mxu0 0
        %410 = vmatprep.subr.bf16.mxu0 0
        %411 = vmatpush1.bf16.msra.mxu0 0
        %412 = vmatprep.subr.bf16.mxu0 0
        %413 = vmatpush1.bf16.msra.mxu0 0
        %414 = vmatprep.subr.bf16.mxu0 0
        %415 = vmatpush1.bf16.msra.mxu0 0
        %416 = vmatprep.subr.bf16.mxu0 0
        %417 = vmatpush1.bf16.msra.mxu0 0
        %418 = vmatprep.subr.bf16.mxu0 0
        %419 = vmatpush1.bf16.msra.mxu0 0
        %420 = vmatprep.mubr.bf16.mxu0 0
        %421 = vmatmul.mubr.bf16.gmra.mrb[0].mxu0 %v332
        %v422 = vpop.f32.mrb[0].mxu0
        %v423 = vadd.f32 0.0, %v422
        %v424 = vpop.f32.mrb[0].mxu0
        %v425 = vpop.f32.mrb[0].mxu0
        %v426 = vadd.f32 0.0, %v425
        %v427 = vpop.f32.mrb[0].mxu0
        %428 = vmatprep.mubr.bf16.mxu0 0
        %429 = vmatmul.mubr.bf16.gmra.mrb[0].mxu0 %v333
        %v430 = vpop.f32.mrb[0].mxu0
        %v431 = vadd.f32 0.0, %v430
        %v432 = vpop.f32.mrb[0].mxu0
        %v433 = vpop.f32.mrb[0].mxu0
        %v434 = vadd.f32 0.0, %v433
        %v435 = vpop.f32.mrb[0].mxu0
        %436 = vmatprep.mubr.bf16.mxu0 0
        %437 = vmatmul.mubr.bf16.gmra.mrb[0].mxu0 %v334
        %v438 = vpop.f32.mrb[0].mxu0
        %v439 = vadd.f32 0.0, %v438
        %v440 = vpop.f32.mrb[0].mxu0
        %v441 = vpop.f32.mrb[0].mxu0
        %v442 = vadd.f32 0.0, %v441
        %v443 = vpop.f32.mrb[0].mxu0
        %444 = vmatprep.mubr.bf16.mxu0 0
        %445 = vmatmul.mubr.bf16.gmra.mrb[0].mxu0 %v335
        %v446 = vpop.f32.mrb[0].mxu0
        %v447 = vadd.f32 0.0, %v446
        %v448 = vpop.f32.mrb[0].mxu0
        %v449 = vpop.f32.mrb[0].mxu0
        %v450 = vadd.f32 0.0, %v449
        %v451 = vpop.f32.mrb[0].mxu0
        %452 = vdwg.mxu0
        %v453 = vpack.c.bf16 %v426, %v423
        %v454 = vpack.c.bf16 %v434, %v431
        %v455 = vpack.c.bf16 %v442, %v439
        %v456 = vpack.c.bf16 %v450, %v447
        %v465 = vunpack.c.l.b16 %v263
        %v466 = vunpack.c.l.b16 %v264
        %v467 = vunpack.c.l.b16 %v265
        %v468 = vunpack.c.l.b16 %v266
        %v469 = vunpack.c.l.b16 %v267
        %v470 = vunpack.c.l.b16 %v268
        %v471 = vunpack.c.l.b16 %v269
        %v472 = vunpack.c.l.b16 %v270
        %v473 = vpack.c.b16 %v466, %v465
        %v474 = vpack.c.b16 %v468, %v467
        %v475 = vpack.c.b16 %v470, %v469
        %v476 = vpack.c.b16 %v472, %v471
        %481 = vmatprep.subr.bf16.mxu0 0
        %482 = vmatpush1.bf16.xpose.msra.mxu0 %v473
        %483 = vmatprep.subr.bf16.mxu0 0
        %484 = vmatpush1.bf16.xpose.msra.mxu0 %v474
        %485 = vmatprep.subr.bf16.mxu0 0
        %486 = vmatpush1.bf16.xpose.msra.mxu0 %v475
        %487 = vmatprep.subr.bf16.mxu0 0
        %488 = vmatpush1.bf16.xpose.msra.mxu0 %v476
        %489 = vmatprep.subr.bf16.mxu0 0
        %490 = vmatpush1.bf16.xpose.msra.mxu0 0
        %491 = vmatprep.subr.bf16.mxu0 0
        %492 = vmatpush1.bf16.xpose.msra.mxu0 0
        %493 = vmatprep.subr.bf16.mxu0 0
        %494 = vmatpush1.bf16.xpose.msra.mxu0 0
        %495 = vmatprep.subr.bf16.mxu0 0
        %496 = vmatpush1.bf16.xpose.msra.mxu0 0
        %497 = vmatprep.subr.bf16.mxu0 0
        %498 = vmatpush1.bf16.xpose.msra.mxu0 0
        %499 = vmatprep.subr.bf16.mxu0 0
        %500 = vmatpush1.bf16.xpose.msra.mxu0 0
        %501 = vmatprep.subr.bf16.mxu0 0
        %502 = vmatpush1.bf16.xpose.msra.mxu0 0
        %503 = vmatprep.subr.bf16.mxu0 0
        %504 = vmatpush1.bf16.xpose.msra.mxu0 0
        %505 = vmatprep.subr.bf16.mxu0 0
        %506 = vmatpush1.bf16.xpose.msra.mxu0 0
        %507 = vmatprep.subr.bf16.mxu0 0
        %508 = vmatpush1.bf16.xpose.msra.mxu0 0
        %509 = vmatprep.subr.bf16.mxu0 0
        %510 = vmatpush1.bf16.xpose.msra.mxu0 0
        %511 = vmatprep.subr.bf16.mxu0 0
        %512 = vmatpush1.bf16.xpose.msra.mxu0 0
        %513 = vmatprep.mubr.bf16.mxu0 0
        %514 = vmatmul.mubr.bf16.gmra.mrb[0].mxu0 %v453
        %v515 = vpop.f32.mrb[0].mxu0
        %v516 = vadd.f32 0.0, %v515
        %v517 = vpop.f32.mrb[0].mxu0
        %v518 = vpop.f32.mrb[0].mxu0
        %v519 = vadd.f32 0.0, %v518
        %v520 = vpop.f32.mrb[0].mxu0
        %521 = vmatprep.mubr.bf16.mxu0 0
        %522 = vmatmul.mubr.bf16.gmra.mrb[0].mxu0 %v454
        %v523 = vpop.f32.mrb[0].mxu0
        %v524 = vadd.f32 0.0, %v523
        %v525 = vpop.f32.mrb[0].mxu0
        %v526 = vpop.f32.mrb[0].mxu0
        %v527 = vadd.f32 0.0, %v526
        %v528 = vpop.f32.mrb[0].mxu0
        %529 = vmatprep.mubr.bf16.mxu0 0
        %530 = vmatmul.mubr.bf16.gmra.mrb[0].mxu0 %v455
        %v531 = vpop.f32.mrb[0].mxu0
        %v532 = vadd.f32 0.0, %v531
        %v533 = vpop.f32.mrb[0].mxu0
        %v534 = vpop.f32.mrb[0].mxu0
        %v535 = vadd.f32 0.0, %v534
        %v536 = vpop.f32.mrb[0].mxu0
        %537 = vmatprep.mubr.bf16.mxu0 0
        %538 = vmatmul.mubr.bf16.gmra.mrb[0].mxu0 %v456
        %v539 = vpop.f32.mrb[0].mxu0
        %v540 = vadd.f32 0.0, %v539
        %v541 = vpop.f32.mrb[0].mxu0
        %v542 = vpop.f32.mrb[0].mxu0
        %v543 = vadd.f32 0.0, %v542
        %v544 = vpop.f32.mrb[0].mxu0
        %545 = vdwg.mxu0
        %vm546 = vcmask 523264
        %v547 = vsel %vm546, %v516, -inf
        %548 = vmax.xlane.f32.xlu0 %v547
        %v549 = vpop.xlane.xlu0 %548
        %v550 = vsel %vm546, %v519, -inf
        %551 = vmax.xlane.f32.xlu0 %v550
        %v552 = vpop.xlane.xlu0 %551
        %v553 = vsel %vm546, %v524, -inf
        %554 = vmax.xlane.f32.xlu0 %v553
        %v555 = vpop.xlane.xlu0 %554
        %v556 = vsel %vm546, %v527, -inf
        %557 = vmax.xlane.f32.xlu0 %v556
        %v558 = vpop.xlane.xlu0 %557
        %v559 = vsel %vm546, %v532, -inf
        %560 = vmax.xlane.f32.xlu0 %v559
        %v561 = vpop.xlane.xlu0 %560
        %v562 = vsel %vm546, %v535, -inf
        %563 = vmax.xlane.f32.xlu0 %v562
        %v564 = vpop.xlane.xlu0 %563
        %v565 = vsel %vm546, %v540, -inf
        %566 = vmax.xlane.f32.xlu0 %v565
        %v567 = vpop.xlane.xlu0 %566
        %v568 = vsel %vm546, %v543, -inf
        %569 = vmax.xlane.f32.xlu0 %v568
        %v570 = vpop.xlane.xlu0 %569
        %v571 = vsub.f32 %v516, %v549
        %v572 = vsub.f32 %v519, %v552
        %v573 = vsub.f32 %v524, %v555
        %v574 = vsub.f32 %v527, %v558
        %v575 = vsub.f32 %v532, %v561
        %v576 = vsub.f32 %v535, %v564
        %v577 = vsub.f32 %v540, %v567
        %v578 = vsub.f32 %v543, %v570
        %v579 = vmul.f32 %v571, 1.442695
        %v580 = vpow.pop %v579
        %v581 = vmul.f32 %v572, 1.442695
        %v582 = vpow.pop %v581
        %v583 = vmul.f32 %v573, 1.442695
        %v584 = vpow.pop %v583
        %v585 = vmul.f32 %v574, 1.442695
        %v586 = vpow.pop %v585
        %v587 = vmul.f32 %v575, 1.442695
        %v588 = vpow.pop %v587
        %v589 = vmul.f32 %v576, 1.442695
        %v590 = vpow.pop %v589
        %v591 = vmul.f32 %v577, 1.442695
        %v592 = vpow.pop %v591
        %v593 = vmul.f32 %v578, 1.442695
        %v594 = vpow.pop %v593
        %v595 = vsel %vm546, %v580, 0.0
        %596 = vadd.xlane.f32.xlu0 %v595
        %v597 = vpop.xlane.xlu0 %596
        %v598 = vsel %vm546, %v582, 0.0
        %599 = vadd.xlane.f32.xlu0 %v598
        %v600 = vpop.xlane.xlu0 %599
        %v601 = vsel %vm546, %v584, 0.0
        %602 = vadd.xlane.f32.xlu0 %v601
        %v603 = vpop.xlane.xlu0 %602
        %v604 = vsel %vm546, %v586, 0.0
        %605 = vadd.xlane.f32.xlu0 %v604
        %v606 = vpop.xlane.xlu0 %605
        %v607 = vsel %vm546, %v588, 0.0
        %608 = vadd.xlane.f32.xlu0 %v607
        %v609 = vpop.xlane.xlu0 %608
        %v610 = vsel %vm546, %v590, 0.0
        %611 = vadd.xlane.f32.xlu0 %v610
        %v612 = vpop.xlane.xlu0 %611
        %v613 = vsel %vm546, %v592, 0.0
        %614 = vadd.xlane.f32.xlu0 %v613
        %v615 = vpop.xlane.xlu0 %614
        %v616 = vsel %vm546, %v594, 0.0
        %617 = vadd.xlane.f32.xlu0 %v616
        %v618 = vpop.xlane.xlu0 %617
        %v619 = vpack.c.bf16 %v582, %v580
        %v620 = vpack.c.bf16 %v586, %v584
        %v621 = vpack.c.bf16 %v590, %v588
        %v622 = vpack.c.bf16 %v594, %v592
        %v624 = vsel %vm546, %v619, 0
        %v627 = vsel %vm546, %v620, 0
        %v630 = vsel %vm546, %v621, 0
        %v633 = vsel %vm546, %v622, 0
        %635 = vmatprep.subr.bf16.mxu0 0
        %636 = vmatpush1.bf16.msra.mxu0 %v473
        %637 = vmatprep.subr.bf16.mxu0 0
        %638 = vmatpush1.bf16.msra.mxu0 %v474
        %639 = vmatprep.subr.bf16.mxu0 0
        %640 = vmatpush1.bf16.msra.mxu0 %v475
        %641 = vmatprep.subr.bf16.mxu0 0
        %642 = vmatpush1.bf16.msra.mxu0 %v476
        %643 = vmatprep.subr.bf16.mxu0 0
        %644 = vmatpush1.bf16.msra.mxu0 0
        %645 = vmatprep.subr.bf16.mxu0 0
        %646 = vmatpush1.bf16.msra.mxu0 0
        %647 = vmatprep.subr.bf16.mxu0 0
        %648 = vmatpush1.bf16.msra.mxu0 0
        %649 = vmatprep.subr.bf16.mxu0 0
        %650 = vmatpush1.bf16.msra.mxu0 0
        %651 = vmatprep.subr.bf16.mxu0 0
        %652 = vmatpush1.bf16.msra.mxu0 0
        %653 = vmatprep.subr.bf16.mxu0 0
        %654 = vmatpush1.bf16.msra.mxu0 0
        %655 = vmatprep.subr.bf16.mxu0 0
        %656 = vmatpush1.bf16.msra.mxu0 0
        %657 = vmatprep.subr.bf16.mxu0 0
        %658 = vmatpush1.bf16.msra.mxu0 0
        %659 = vmatprep.subr.bf16.mxu0 0
        %660 = vmatpush1.bf16.msra.mxu0 0
        %661 = vmatprep.subr.bf16.mxu0 0
        %662 = vmatpush1.bf16.msra.mxu0 0
        %663 = vmatprep.subr.bf16.mxu0 0
        %664 = vmatpush1.bf16.msra.mxu0 0
        %665 = vmatprep.subr.bf16.mxu0 0
        %666 = vmatpush1.bf16.msra.mxu0 0
        %667 = vmatprep.mubr.bf16.mxu0 0
        %668 = vmatmul.mubr.bf16.gmra.mrb[0].mxu0 %v624
        %v669 = vpop.f32.mrb[0].mxu0
        %v670 = vadd.f32 0.0, %v669
        %v671 = vpop.f32.mrb[0].mxu0
        %v672 = vpop.f32.mrb[0].mxu0
        %v673 = vadd.f32 0.0, %v672
        %v674 = vpop.f32.mrb[0].mxu0
        %675 = vmatprep.mubr.bf16.mxu0 0
        %676 = vmatmul.mubr.bf16.gmra.mrb[0].mxu0 %v627
        %v677 = vpop.f32.mrb[0].mxu0
        %v678 = vadd.f32 0.0, %v677
        %v679 = vpop.f32.mrb[0].mxu0
        %v680 = vpop.f32.mrb[0].mxu0
        %v681 = vadd.f32 0.0, %v680
        %v682 = vpop.f32.mrb[0].mxu0
        %683 = vmatprep.mubr.bf16.mxu0 0
        %684 = vmatmul.mubr.bf16.gmra.mrb[0].mxu0 %v630
        %v685 = vpop.f32.mrb[0].mxu0
        %v686 = vadd.f32 0.0, %v685
        %v687 = vpop.f32.mrb[0].mxu0
        %v688 = vpop.f32.mrb[0].mxu0
        %v689 = vadd.f32 0.0, %v688
        %v690 = vpop.f32.mrb[0].mxu0
        %691 = vmatprep.mubr.bf16.mxu0 0
        %692 = vmatmul.mubr.bf16.gmra.mrb[0].mxu0 %v633
        %v693 = vpop.f32.mrb[0].mxu0
        %v694 = vadd.f32 0.0, %v693
        %v695 = vpop.f32.mrb[0].mxu0
        %v696 = vpop.f32.mrb[0].mxu0
        %v697 = vadd.f32 0.0, %v696
        %v698 = vpop.f32.mrb[0].mxu0
        %699 = vdwg.mxu0
        %v700 = vrcp.pop %v597
        %v701 = vrcp.pop %v600
        %v702 = vrcp.pop %v603
        %v703 = vrcp.pop %v606
        %v704 = vrcp.pop %v609
        %v705 = vrcp.pop %v612
        %v706 = vrcp.pop %v615
        %v707 = vrcp.pop %v618
        %v708 = vmul.f32 %v670, %v700
        %v709 = vmul.f32 %v673, %v701
        %v710 = vmul.f32 %v678, %v702
        %v711 = vmul.f32 %v681, %v703
        %v712 = vmul.f32 %v686, %v704
        %v713 = vmul.f32 %v689, %v705
        %v714 = vmul.f32 %v694, %v706
        %v715 = vmul.f32 %v697, %v707
        %v716 = vpack.c.bf16 %v709, %v708
        %v717 = vpack.c.bf16 %v711, %v710
        %v718 = vpack.c.bf16 %v713, %v712
        %v719 = vpack.c.bf16 %v715, %v714
        %v736 = vunpack.c.l.b16 %v299
        %v737 = vunpack.c.l.b16 %v300
        %v738 = vunpack.c.l.b16 %v301
        %v739 = vunpack.c.l.b16 %v302
        %v740 = vunpack.c.l.b16 %v303
        %v741 = vunpack.c.l.b16 %v304
        %v742 = vunpack.c.l.b16 %v305
        %v743 = vunpack.c.l.b16 %v306
        %v744 = vunpack.c.l.b16 %v307
        %v745 = vunpack.c.l.b16 %v308
        %v746 = vunpack.c.l.b16 %v309
        %v747 = vunpack.c.l.b16 %v310
        %v748 = vunpack.c.l.b16 %v311
        %v749 = vunpack.c.l.b16 %v312
        %v750 = vunpack.c.l.b16 %v313
        %v751 = vunpack.c.l.b16 %v314
        %v752 = vpack.c.b16 %v737, %v736
        %v753 = vpack.c.b16 %v739, %v738
        %v754 = vpack.c.b16 %v741, %v740
        %v755 = vpack.c.b16 %v743, %v742
        %v756 = vpack.c.b16 %v745, %v744
        %v757 = vpack.c.b16 %v747, %v746
        %v758 = vpack.c.b16 %v749, %v748
        %v759 = vpack.c.b16 %v751, %v750
        %768 = vmatprep.subr.bf16.mxu0 0
        %769 = vmatpush1.bf16.msra.mxu0 %v752
        %770 = vmatprep.subr.bf16.mxu0 0
        %771 = vmatpush1.bf16.msra.mxu0 %v753
        %772 = vmatprep.subr.bf16.mxu0 0
        %773 = vmatpush1.bf16.msra.mxu0 %v754
        %774 = vmatprep.subr.bf16.mxu0 0
        %775 = vmatpush1.bf16.msra.mxu0 %v755
        %776 = vmatprep.subr.bf16.mxu0 0
        %777 = vmatpush1.bf16.msra.mxu0 %v756
        %778 = vmatprep.subr.bf16.mxu0 0
        %779 = vmatpush1.bf16.msra.mxu0 %v757
        %780 = vmatprep.subr.bf16.mxu0 0
        %781 = vmatpush1.bf16.msra.mxu0 %v758
        %782 = vmatprep.subr.bf16.mxu0 0
        %783 = vmatpush1.bf16.msra.mxu0 %v759
        %784 = vmatprep.subr.bf16.mxu0 0
        %785 = vmatpush1.bf16.msra.mxu0 0
        %786 = vmatprep.subr.bf16.mxu0 0
        %787 = vmatpush1.bf16.msra.mxu0 0
        %788 = vmatprep.subr.bf16.mxu0 0
        %789 = vmatpush1.bf16.msra.mxu0 0
        %790 = vmatprep.subr.bf16.mxu0 0
        %791 = vmatpush1.bf16.msra.mxu0 0
        %792 = vmatprep.subr.bf16.mxu0 0
        %793 = vmatpush1.bf16.msra.mxu0 0
        %794 = vmatprep.subr.bf16.mxu0 0
        %795 = vmatpush1.bf16.msra.mxu0 0
        %796 = vmatprep.subr.bf16.mxu0 0
        %797 = vmatpush1.bf16.msra.mxu0 0
        %798 = vmatprep.subr.bf16.mxu0 0
        %799 = vmatpush1.bf16.msra.mxu0 0
        %800 = vmatprep.mubr.bf16.mxu0 0
        %801 = vmatmul.mubr.bf16.gmra.mrb[0].mxu0 %v716
        %v802 = vpop.f32.mrb[0].mxu0
        %v803 = vadd.f32 0.0, %v802
        %v804 = vpop.f32.mrb[0].mxu0
        %v805 = vpop.f32.mrb[0].mxu0
        %v806 = vadd.f32 0.0, %v805
        %v807 = vpop.f32.mrb[0].mxu0
        %808 = vmatprep.mubr.bf16.mxu0 0
        %809 = vmatmul.mubr.bf16.gmra.mrb[0].mxu0 %v717
        %v810 = vpop.f32.mrb[0].mxu0
        %v811 = vadd.f32 0.0, %v810
        %v812 = vpop.f32.mrb[0].mxu0
        %v813 = vpop.f32.mrb[0].mxu0
        %v814 = vadd.f32 0.0, %v813
        %v815 = vpop.f32.mrb[0].mxu0
        %816 = vmatprep.mubr.bf16.mxu0 0
        %817 = vmatmul.mubr.bf16.gmra.mrb[0].mxu0 %v718
        %v818 = vpop.f32.mrb[0].mxu0
        %v819 = vadd.f32 0.0, %v818
        %v820 = vpop.f32.mrb[0].mxu0
        %v821 = vpop.f32.mrb[0].mxu0
        %v822 = vadd.f32 0.0, %v821
        %v823 = vpop.f32.mrb[0].mxu0
        %824 = vmatprep.mubr.bf16.mxu0 0
        %825 = vmatmul.mubr.bf16.gmra.mrb[0].mxu0 %v719
        %v826 = vpop.f32.mrb[0].mxu0
        %v827 = vadd.f32 0.0, %v826
        %v828 = vpop.f32.mrb[0].mxu0
        %v829 = vpop.f32.mrb[0].mxu0
        %v830 = vadd.f32 0.0, %v829
        %v831 = vpop.f32.mrb[0].mxu0
        %832 = vdwg.mxu0
        %v833 = vstv %s315
        %v834 = vmul.f32 %v803, %v833
        %v835 = vmul.f32 %v806, %v833
        %v836 = vmul.f32 %v811, %v833
        %v837 = vmul.f32 %v814, %v833
        %v838 = vmul.f32 %v819, %v833
        %v839 = vmul.f32 %v822, %v833
        %v840 = vmul.f32 %v827, %v833
        %v841 = vmul.f32 %v830, %v833
        %v842 = vunpack.c.l.bf16 %v275
        %v843 = vunpack.c.l.bf16 %v276
        %v844 = vunpack.c.l.bf16 %v277
        %v845 = vunpack.c.l.bf16 %v278
        %v846 = vunpack.c.l.bf16 %v279
        %v847 = vunpack.c.l.bf16 %v280
        %v848 = vunpack.c.l.bf16 %v281
        %v849 = vunpack.c.l.bf16 %v282
        %v850 = vadd.f32 %v834, %v842
        %v851 = vadd.f32 %v835, %v843
        %v852 = vadd.f32 %v836, %v844
        %v853 = vadd.f32 %v837, %v845
        %v854 = vadd.f32 %v838, %v846
        %v855 = vadd.f32 %v839, %v847
        %v856 = vadd.f32 %v840, %v848
        %v857 = vadd.f32 %v841, %v849
        %858 = vst [vmem:[%s259] sm:$0xff] %v850
        %859 = vst [vmem:[%s259 + $0x8] sm:$0xff] %v851
        %860 = vst [vmem:[%s259 + $0x10] sm:$0xff] %v852
        %861 = vst [vmem:[%s259 + $0x18] sm:$0xff] %v853
        %862 = vst [vmem:[%s259 + $0x20] sm:$0xff] %v854
        %863 = vst [vmem:[%s259 + $0x28] sm:$0xff] %v855
        %864 = vst [vmem:[%s259 + $0x30] sm:$0xff] %v856
        %865 = vst [vmem:[%s259 + $0x38] sm:$0xff] %v857
        %s866 = sand.u32 %s134, 1
        %s867 = scalar_lea.sflag [#allocation5], %s866
        %s868 = sand.u32 %s134, 1
        %s869 = smul.addr %s868, 64
        %s870 = scalar_lea.vmem [#allocation9], %s869
        // Predicated region
        $region49: #{tpu_custom_call.1} parent=35 // pred_check
          %p871 = pneg %p144
        $region50: #{tpu_custom_call.1} parent=35 // pred_check_branch
          %873 = sbr.rel (%p871) target = $region52
        $region51: #{tpu_custom_call.1} parent=35 // pred_region
          %s874 = smul.u32 8, %s28
          %s876 = ssub.s32 1024, 1024
          %877 = vsyncadd %s867, %s876
          %s878 = smul.addr %s27, 8
          %s879 = sadd.s32 %s874, %s878
          %s880 = smul.addr %s879, 128
          %s881 = scalar_lea.hbm %s4, %s880
          %s882 = sshll.u32 %s870, 4
          %s883 = int_to_ptr.vmem [resolvable:$true] %s882
          %888 = dma.vmem_to_hbm [thread:$0]  %s883, 1024, %s881, %s867, 128, 128, 8
        $region52: #{tpu_custom_call.1} parent=35 // pred_fallthru
          _
      $region36: #{tpu_custom_call.1} parent=5 // pred_fallthru
        _
      %p889 = scmp.le.s32.totalorder 2, %s18
      // Predicated region
      $region53: #{tpu_custom_call.1} parent=5 // pred_check
        %p890 = pneg %p889
      $region54: #{tpu_custom_call.1} parent=5 // pred_check_branch
        %892 = sbr.rel (%p890) target = $region56
      $region55: #{tpu_custom_call.1} parent=5 // pred_region
        %s893 = ssub.s32 %s18, 2
        // Predicated region
        $region57: #{tpu_custom_call.1} parent=55 // pred_check
          %p894 = pneg %p150
        $region58: #{tpu_custom_call.1} parent=55 // pred_check_branch
          %896 = sbr.rel (%p894) target = $region60
        $region59: #{tpu_custom_call.1} parent=55 // pred_region
          %s897 = sand.u32 %s135, 1
          %s898 = scalar_lea.sflag [#allocation5], %s897
          %s899 = sand.u32 %s135, 1
          %s900 = smul.addr %s899, 64
          %s901 = scalar_lea.vmem [#allocation9], %s900
          %902 = dma.done %s898, 1024
        $region60: #{tpu_custom_call.1} parent=55 // pred_fallthru
          _
      $region56: #{tpu_custom_call.1} parent=5 // pred_fallthru
        _
    $region6: #{tpu_custom_call.1} parent=1 // loop_footer
      %s22 = sadd.s32 1, %s18
    $region7: #{tpu_custom_call.1} parent=1 // loop_footer_branch
      %17 = sbr.rel target = $region3
    $region8: #{tpu_custom_call.1} parent=1 // loop_exit
      _
    %903 = vsyncpa [#allocation4], 1
    %s904 = scalar_lea.sflag [#allocation4], 1
    %905 = vsyncpa %s904, 1
    %906 = vsyncpa [#allocation7], 1
    %907 = vsyncpa [#allocation5], 1
    %s908 = scalar_lea.sflag [#allocation5], 1
    %909 = vsyncpa %s908, 1

</llo_original>
